<compile_context>
chip_gen: v5e
topology: v5e:2x2
jax: 0.10.0
libtpu: 0.0.40
codegen_flags: <defaults>
</compile_context>

<pallas_src>
import functools
import math

import jax
import jax.numpy as jnp
from jax.experimental import pallas as pl
from jax.experimental.pallas import tpu as pltpu


# Conservative sizing: pipelined buffers + f32 intermediates stay under
# ~24 MiB; scoped limit raised to 48 MiB (physical VMEM is 128/128/64 MiB
# per TensorCore on v5e/v6e/v7x).
_VMEM_TILE_BUDGET = 24 * 1024 * 1024
_VMEM_LIMIT_BYTES = 48 * 1024 * 1024


def _round_up(x, m):
    return ((x + m - 1) // m) * m


def _sublane_multiple(dtype):
    # 8 sublanes of 32-bit; sub-32-bit dtypes pack along sublanes.
    return 8 * max(1, 4 // jnp.dtype(dtype).itemsize)


def _safe_softmax_rows_kernel(x_ref, o_ref):
    """Safe softmax over the last (lane) axis of a (row_tile, D) block."""
    x = x_ref[...]
    big = float(jnp.finfo(x.dtype).max)
    xf = jnp.clip(x.astype(jnp.float32), -big, big)   # +/-inf -> +/-finfo.max
    m = jnp.max(xf, axis=-1, keepdims=True)
    e = jnp.exp(xf - m)
    s = jnp.sum(e, axis=-1, keepdims=True)
    o_ref[...] = (e * pl.reciprocal(s, approx=True)).astype(o_ref.dtype)


def _safe_softmax_cols_kernel(x_ref, o_ref):
    """Safe softmax over the first (sublane) axis of a (D, col_tile) block."""
    x = x_ref[...]
    big = float(jnp.finfo(x.dtype).max)
    xf = jnp.clip(x.astype(jnp.float32), -big, big)
    m = jnp.max(xf, axis=0, keepdims=True)
    e = jnp.exp(xf - m)
    s = jnp.sum(e, axis=0, keepdims=True)
    o_ref[...] = (e * pl.reciprocal(s, approx=True)).astype(o_ref.dtype)


def _softmax_rows(x2d, rows, D):
    """Path A (D >= 128): D on the lane axis, large row tiles on sublanes."""
    itemsize = jnp.dtype(x2d.dtype).itemsize
    sub_mult = _sublane_multiple(x2d.dtype)
    # 2x double-buffered input + 2x double-buffered output (input dtype) plus
    # ~3 f32 intermediates per element.
    bytes_per_row = D * (4 * itemsize + 3 * 4)
    row_tile = (_VMEM_TILE_BUDGET // bytes_per_row) // sub_mult * sub_mult
    row_tile = max(sub_mult, min(row_tile, 1024, _round_up(rows, sub_mult)))

    grid = (pl.cdiv(rows, row_tile),)
    return pl.pallas_call(
        _safe_softmax_rows_kernel,
        out_shape=jax.ShapeDtypeStruct((rows, D), x2d.dtype),
        grid_spec=pltpu.PrefetchScalarGridSpec(
            num_scalar_prefetch=0,
            grid=grid,
            in_specs=[pl.BlockSpec((row_tile, D), lambda i: (i, 0))],
            out_specs=pl.BlockSpec((row_tile, D), lambda i: (i, 0)),
        ),
        compiler_params=pltpu.CompilerParams(
            dimension_semantics=("parallel",),
            vmem_limit_bytes=_VMEM_LIMIT_BYTES,
        ),
    )(x2d)


def _softmax_cols(x2d, rows, D):
    """Path B (D < 128): transpose so rows ride the 128-lane axis."""
    xt = x2d.T  # (D, rows): lane-dense input/output, unmasked full-width stores.
    itemsize = jnp.dtype(x2d.dtype).itemsize
    bytes_per_col = D * (4 * itemsize + 3 * 4)
    col_tile = (_VMEM_TILE_BUDGET // bytes_per_col) // 128 * 128
    col_tile = max(128, min(col_tile, 8192, _round_up(rows, 128)))

    grid = (pl.cdiv(rows, col_tile),)
    out_t = pl.pallas_call(
        _safe_softmax_cols_kernel,
        out_shape=jax.ShapeDtypeStruct((D, rows), x2d.dtype),
        grid_spec=pltpu.PrefetchScalarGridSpec(
            num_scalar_prefetch=0,
            grid=grid,
            in_specs=[pl.BlockSpec((D, col_tile), lambda i: (0, i))],
            out_specs=pl.BlockSpec((D, col_tile), lambda i: (0, i)),
        ),
        compiler_params=pltpu.CompilerParams(
            dimension_semantics=("parallel",),
            vmem_limit_bytes=_VMEM_LIMIT_BYTES,
        ),
    )(xt)
    return out_t.T


@functools.partial(jax.jit, static_argnames=("dim",))
def safe_softmax(x, dim=-1):
    """SafeSoftmax over `dim` of x (any rank). Matches the PyTorch module."""
    axis = dim % x.ndim
    xm = jnp.moveaxis(x, axis, -1) if axis != x.ndim - 1 else x
    shp = xm.shape
    D = shp[-1]
    rows = math.prod(shp[:-1]) if len(shp) > 1 else 1
    x2d = xm.reshape(rows, D)

    if D >= 128:
        out2d = _softmax_rows(x2d, rows, D)
    else:
        out2d = _softmax_cols(x2d, rows, D)

    out = out2d.reshape(shp)
    if axis != x.ndim - 1:
        out = jnp.moveaxis(out, -1, axis)
    return out


def _reference(x, dim=-1):
    big = jnp.finfo(x.dtype).max
    xr = jnp.where(x == jnp.inf, big, x)
    xr = jnp.where(x == -jnp.inf, -big, xr)
    xs = xr - jnp.max(xr, axis=dim, keepdims=True)
    return jax.nn.softmax(xs, axis=dim)


if __name__ == "__main__":
    key = jax.random.PRNGKey(0)
    k1, k2 = jax.random.split(key)

    # Narrow-D case (exercises the lane-dense transposed path, D=16 < 128).
    B, C, H, W = 2, 4, 16, 16
    x = jax.random.normal(k1, (B, C, H, W), dtype=jnp.float32) * 5.0
    x = x.at[0, 0, 0, 3].set(jnp.inf)
    x = x.at[1, 2, 5, 7].set(-jnp.inf)
    # Whole row of -inf -> uniform 1/D (the module's clamp semantics).
    x = x.at[1, 3, 9, :].set(-jnp.inf)

    out = safe_softmax(x)
    jax.block_until_ready(out)
    ref = _reference(x)
    assert out.shape == x.shape and out.dtype == x.dtype
    # Tolerance accounts for pl.reciprocal(approx=True) in the normalization.
    assert jnp.allclose(out, ref, atol=2e-3, rtol=2e-3), "mismatch (narrow-D path)"

    # Wide-D case (exercises the rows-on-sublane path, D=256).
    xw = jax.random.normal(k2, (2, 4, 8, 256), dtype=jnp.float32) * 5.0
    xw = xw.at[0, 1, 2, 100].set(jnp.inf)
    xw = xw.at[1, 0, 7, :].set(-jnp.inf)

    outw = safe_softmax(xw)
    jax.block_until_ready(outw)
    refw = _reference(xw)
    assert outw.shape == xw.shape and outw.dtype == xw.dtype
    assert jnp.allclose(outw, refw, atol=2e-3, rtol=2e-3), "mismatch (wide-D path)"

    print("KERNEL_OK")
</pallas_src>

<mosaic_0001>
module attributes {stable_mosaic.version = 11 : i64} {
  func.func @_safe_softmax_cols_kernel(%arg0: i32, %arg1: memref<16x128xf32, #tpu.memory_space<vmem>>, %arg2: memref<16x128xf32, #tpu.memory_space<vmem>>) attributes {dimension_semantics = [#tpu.dimension_semantics<parallel>], iteration_bounds = array<i64: 1>, scalar_prefetch = 0 : i64, scratch_operands = 0 : i64, tpu.core_type = #tpu.core_type<tc>, window_params = [{transform_indices = @transform_0, window_bounds = array<i64: 16, 128>}, {transform_indices = @transform_1, window_bounds = array<i64: 16, 128>}]} {
    %c0 = arith.constant 0 : index
    %c0_0 = arith.constant 0 : index
    %0 = vector.load %arg1[%c0, %c0_0] : memref<16x128xf32, #tpu.memory_space<vmem>>, vector<16x128xf32>
    %cst = arith.constant -3.40282347E+38 : f32
    %cst_1 = arith.constant 3.40282347E+38 : f32
    %1 = vector.broadcast %cst : f32 to vector<16x128xf32>
    %2 = arith.maximumf %1, %0 : vector<16x128xf32>
    %3 = vector.broadcast %cst_1 : f32 to vector<16x128xf32>
    %4 = arith.minimumf %3, %2 : vector<16x128xf32>
    %cst_2 = arith.constant dense<0xFF800000> : vector<128xf32>
    %5 = vector.multi_reduction <maximumf>, %4, %cst_2 [0] : vector<16x128xf32> to vector<128xf32>
    %6 = vector.shape_cast %5 : vector<128xf32> to vector<1x128xf32>
    %7 = vector.broadcast %6 : vector<1x128xf32> to vector<16x128xf32>
    %8 = arith.subf %4, %7 : vector<16x128xf32>
    %9 = math.exp %8 : vector<16x128xf32>
    %cst_3 = arith.constant dense<0.000000e+00> : vector<128xf32>
    %10 = vector.multi_reduction <add>, %9, %cst_3 [0] : vector<16x128xf32> to vector<128xf32>
    %11 = vector.shape_cast %10 : vector<128xf32> to vector<1x128xf32>
    %12 = tpu.reciprocal %11 {approx = true} : vector<1x128xf32> -> vector<1x128xf32>
    %13 = vector.broadcast %12 : vector<1x128xf32> to vector<16x128xf32>
    %14 = arith.mulf %9, %13 : vector<16x128xf32>
    %c0_4 = arith.constant 0 : index
    %c0_5 = arith.constant 0 : index
    %15 = vector.load %arg2[%c0_4, %c0_5] : memref<16x128xf32, #tpu.memory_space<vmem>>, vector<16x128xf32>
    tpu.vector_store %arg2[%c0_4, %c0_5], %14 {strides = array<i32>} : memref<16x128xf32, #tpu.memory_space<vmem>>, vector<16x128xf32>,
    return
  }
  func.func @transform_0(%arg0: i32) -> (i32, i32) {
    %c0_i32 = arith.constant 0 : i32
    %c0_i32_0 = arith.constant 0 : i32
    return %c0_i32, %arg0 : i32, i32
  }
  func.func @transform_1(%arg0: i32) -> (i32, i32) {
    %c0_i32 = arith.constant 0 : i32
    %c0_i32_0 = arith.constant 0 : i32
    return %c0_i32, %arg0 : i32, i32
  }
}

</mosaic_0001>

<llo_original>
// kernel: safe_softmax.1
$region0: #{safe_softmax.1}
  #allocation0 [shape = 'u32[]', space=smem, size = 0x4, offset = 0x4, fixed_abs, tag = 'smem constant byte address 0x4 - core index']
  #allocation1 [shape = 'u32[72,128]{1,0:T(1,128)}', space=vmem, size = 0x9000, scoped, tag = 'internal scratch']
  %s0 = inlined_call_operand.vmem [shape: f32[16,128], index: 0, kind: input, shape index: {}]
  %s1 = inlined_call_operand.vmem [shape: f32[16,128], index: 1, kind: output, shape index: {}]
  %s2 = sld [smem:[#allocation0]]
  $region14: #{safe_softmax.1} parent=0
    _
  %s4 = ssub.s32 1, %s2
  %s5 = scalar_select 0, %s4, %s2
  // Predicated region
  $region2: #{safe_softmax.1} parent=0 // pred_check
    _
  $region3: #{safe_softmax.1} parent=0 // pred_check_branch
    %7 = sbr.rel (0) target = $region5
  $region4: #{safe_softmax.1} parent=0 // pred_region
    _
  $region5: #{safe_softmax.1} parent=0 // pred_fallthru
    _
  %v8 = vld [vmem:[%s0] sm:$0xff]
  %v9 = vld [vmem:[%s0 + $0x8] sm:$0xff]
  %v10 = vmax.f32 %v8, -3.4028235e+38
  %v11 = vmax.f32 %v9, -3.4028235e+38
  %v12 = vmin.f32 %v10, 3.4028235e+38
  %v13 = vmin.f32 %v11, 3.4028235e+38
  %v14 = vmax.f32 %v12, %v13
  %v15 = vrot.slane %v14, 4
  %v16 = vmax.f32 %v14, %v15
  %v17 = vrot.slane %v16, 2
  %v18 = vmax.f32 %v16, %v17
  %v19 = vrot.slane %v18, 1
  %v20 = vmax.f32 %v18, %v19
  %v21 = vsub.f32 %v12, %v20
  %v22 = vsub.f32 %v13, %v20
  %v23 = vmul.f32 %v21, 1.442695
  %v24 = vpow.pop %v23
  %v25 = vmul.f32 %v22, 1.442695
  %v26 = vpow.pop %v25
  %v27 = vadd.f32 %v24, %v26
  %v28 = vrot.slane %v27, 4
  %v29 = vadd.f32 %v27, %v28
  %v30 = vrot.slane %v29, 2
  %v31 = vadd.f32 %v29, %v30
  %v32 = vrot.slane %v31, 1
  %v33 = vadd.f32 %v31, %v32
  %v34 = vrcp.pop %v33
  %v35 = vmul.f32 %v24, %v34
  %v36 = vmul.f32 %v26, %v34
  %37 = vst [vmem:[%s1] sm:$0xff] %v35
  %38 = vst [vmem:[%s1 + $0x8] sm:$0xff] %v36
  // Predicated region
  $region6: #{safe_softmax.1} parent=0 // pred_check
    _
  $region7: #{safe_softmax.1} parent=0 // pred_check_branch
    %40 = sbr.rel (0) target = $region9
  $region8: #{safe_softmax.1} parent=0 // pred_region
    _
  $region9: #{safe_softmax.1} parent=0 // pred_fallthru
    _
  // Predicated region
  $region10: #{safe_softmax.1} parent=0 // pred_check
    _
  $region11: #{safe_softmax.1} parent=0 // pred_check_branch
    %42 = sbr.rel (0) target = $region13
  $region12: #{safe_softmax.1} parent=0 // pred_region
    _
  $region13: #{safe_softmax.1} parent=0 // pred_fallthru
    _

</llo_original>
